<compile_context>
chip_gen: v5e
topology: v5e:2x2
jax: 0.10.0
libtpu: 0.0.40
codegen_flags: <defaults>
</compile_context>

<pallas_src>
import math

import jax
import jax.numpy as jnp
from jax import lax
from jax.experimental import pallas as pl
from jax.experimental.pallas import tpu as pltpu


_CHUNK = 512  # lanes per inner step; (Rp, 512) f32 intermediates stay well under 64 vregs


def sinc_rbf_kernel(pin_ref, r_ref, out_ref):
    """pin_ref: (Rp, 1) = pi*n, r_ref: (1, TB), out_ref: (TB, Rp)."""
    pin = pin_ref[...]                                # (Rp, 1), resident across the grid
    n_chunks = r_ref.shape[1] // _CHUNK               # static

    def do_chunk(c, carry):
        off = pl.multiple_of(c * _CHUNK, _CHUNK)
        r = r_ref[:, pl.ds(off, _CHUNK)]              # (1, C) lane-dense distances
        is_zero = r == 0.0
        inv_r = pl.reciprocal(jnp.where(is_zero, 1.0, r))   # exact; only on (1, C)
        vals = jnp.sin(pin * r) * inv_r               # (Rp, C): lane-dense VPU work
        vals = jnp.where(is_zero, pin, vals)          # sinc(0) = 1 -> pi * n
        # XLU transpose to the module's (batch, rbf) layout; store covers the block.
        out_ref[pl.ds(off, _CHUNK), :] = vals.T       # (C, Rp)
        return carry

    lax.fori_loop(0, n_chunks, do_chunk, None, unroll=False)


def sinc_radial_basis(r, n, *, tile_b=4096):
    """Pallas forward of SincRadialBasis.

    r: (B,) or (B, 1) float32 distances
    n: (1, R) float32 buffer/param (= arange(1, R+1) / rbound_upper)
    returns: (B, R) float32  ==  pi * n * sinc(n * r)
    """
    assert tile_b % _CHUNK == 0, "tile_b must be a multiple of 512"
    r_flat = jnp.asarray(r, jnp.float32).reshape(-1)
    n_flat = jnp.asarray(n, jnp.float32).reshape(-1)
    B = r_flat.shape[0]
    R = n_flat.shape[0]

    tb = min(tile_b, pl.cdiv(B, _CHUNK) * _CHUNK)     # lane/chunk-aligned batch tile
    Bp = pl.cdiv(B, tb) * tb                          # batch padded to a tile multiple
    Rp = pl.cdiv(R, 8) * 8                            # rbf padded to a sublane multiple

    if Bp != B:
        r_flat = jnp.pad(r_flat, (0, Bp - B))         # r = 0 padding -> rows pi*n, sliced off
    pin = math.pi * n_flat                            # fold pi into n once, outside the kernel
    if Rp != R:
        pin = jnp.pad(pin, (0, Rp - R))               # n = 0 padding -> zero columns, sliced off

    r_row = r_flat.reshape(1, Bp)                     # batch on the 128-lane axis
    pin_col = pin.reshape(Rp, 1)

    out = pl.pallas_call(
        sinc_rbf_kernel,
        out_shape=jax.ShapeDtypeStruct((Bp, Rp), jnp.float32),
        grid_spec=pltpu.PrefetchScalarGridSpec(
            num_scalar_prefetch=0,
            grid=(Bp // tb,),
            in_specs=[
                pl.BlockSpec((Rp, 1), lambda i: (0, 0)),   # pi*n: resident, DMA'd once
                pl.BlockSpec((1, tb), lambda i: (0, i)),   # r: tiled over lanes
            ],
            # Output already in (batch, rbf) orientation; each block is a contiguous
            # run of full rows in HBM -> single contiguous writeback DMA per step.
            out_specs=pl.BlockSpec((tb, Rp), lambda i: (i, 0)),
        ),
        compiler_params=pltpu.CompilerParams(
            dimension_semantics=("parallel",),
        ),
    )(pin_col, r_row)

    return out[:B, :R]


if __name__ == "__main__":
    num_rbf = 16
    rbound_upper = 5.0

    # Buffer init matching SincRadialBasis.__init__ (rbf_trainable=False):
    n = jnp.arange(1, num_rbf + 1, dtype=jnp.float32)[None, :] / rbound_upper

    # Small case, exercises the sinc(0) branch and heavy batch padding.
    B = 16
    r = jax.random.uniform(jax.random.PRNGKey(0), (B, 1), dtype=jnp.float32,
                           minval=0.0, maxval=rbound_upper)
    r = r.at[0, 0].set(0.0)
    out = jax.block_until_ready(sinc_radial_basis(r, n))
    ref = math.pi * n * jnp.sinc(n * r)
    assert out.shape == (B, num_rbf)
    assert jnp.allclose(out, ref, atol=1e-5, rtol=1e-5)

    # Multi-grid-step path with batch padding (tb=512, grid=3).
    B2 = 1200
    r2 = jax.random.uniform(jax.random.PRNGKey(1), (B2, 1), dtype=jnp.float32,
                            minval=0.0, maxval=rbound_upper)
    out2 = jax.block_until_ready(sinc_radial_basis(r2, n, tile_b=512))
    ref2 = math.pi * n * jnp.sinc(n * r2)
    assert out2.shape == (B2, num_rbf)
    assert jnp.allclose(out2, ref2, atol=1e-5, rtol=1e-5)

    # Odd num_rbf (sublane padding) + multi-chunk inner loop (tb=1024 -> 2 chunks).
    num_rbf3, rb3 = 7, 3.0
    n3 = jnp.arange(1, num_rbf3 + 1, dtype=jnp.float32)[None, :] / rb3
    B3 = 700
    r3 = jax.random.uniform(jax.random.PRNGKey(2), (B3, 1), dtype=jnp.float32,
                            minval=0.0, maxval=rb3)
    out3 = jax.block_until_ready(sinc_radial_basis(r3, n3, tile_b=1024))
    ref3 = math.pi * n3 * jnp.sinc(n3 * r3)
    assert out3.shape == (B3, num_rbf3)
    assert jnp.allclose(out3, ref3, atol=1e-5, rtol=1e-5)

    print("KERNEL_OK")
</pallas_src>

<mosaic_0001>
module attributes {stable_mosaic.version = 11 : i64} {
  func.func @sinc_rbf_kernel(%arg0: i32, %arg1: memref<16x1xf32, #tpu.memory_space<vmem>>, %arg2: memref<1x512xf32, #tpu.memory_space<vmem>>, %arg3: memref<512x16xf32, #tpu.memory_space<vmem>>) attributes {dimension_semantics = [#tpu.dimension_semantics<parallel>], iteration_bounds = array<i64: 1>, scalar_prefetch = 0 : i64, scratch_operands = 0 : i64, tpu.core_type = #tpu.core_type<tc>, window_params = [{pipeline_mode = #tpu.pipeline_mode<synchronous>, transform_indices = @transform_0, window_bounds = array<i64: 16, 1>}, {transform_indices = @transform_1, window_bounds = array<i64: 1, 512>}, {transform_indices = @transform_2, window_bounds = array<i64: 512, 16>}]} {
    %c0 = arith.constant 0 : index
    %c0_0 = arith.constant 0 : index
    %0 = vector.load %arg1[%c0, %c0_0] : memref<16x1xf32, #tpu.memory_space<vmem>>, vector<16x1xf32>
    %c0_i32 = arith.constant 0 : i32
    %c512_i32 = arith.constant 512 : i32
    %1 = arith.muli %c0_i32, %c512_i32 : i32
    %2 = tpu.assume_multiple %1, 512 : i32
    %c0_1 = arith.constant 0 : index
    %3 = arith.index_cast %2 : i32 to index
    %4 = vector.load %arg2[%c0_1, %3] : memref<1x512xf32, #tpu.memory_space<vmem>>, vector<1x512xf32>
    %cst = arith.constant 0.000000e+00 : f32
    %5 = vector.broadcast %cst : f32 to vector<1x512xf32>
    %6 = arith.cmpf oeq, %4, %5 : vector<1x512xf32>
    %cst_2 = arith.constant 1.000000e+00 : f32
    %7 = vector.broadcast %cst_2 : f32 to vector<1x512xf32>
    %8 = arith.select %6, %7, %4 : vector<1x512xi1>, vector<1x512xf32>
    %9 = tpu.reciprocal %8 : vector<1x512xf32> -> vector<1x512xf32>
    %10 = vector.broadcast %0 : vector<16x1xf32> to vector<16x512xf32>
    %11 = vector.broadcast %4 : vector<1x512xf32> to vector<16x512xf32>
    %12 = arith.mulf %10, %11 : vector<16x512xf32>
    %13 = math.sin %12 : vector<16x512xf32>
    %14 = vector.broadcast %9 : vector<1x512xf32> to vector<16x512xf32>
    %15 = arith.mulf %13, %14 : vector<16x512xf32>
    %16 = vector.shape_cast %6 : vector<1x512xi1> to vector<1x512xi1>
    %17 = vector.broadcast %16 : vector<1x512xi1> to vector<16x512xi1>
    %18 = vector.shape_cast %0 : vector<16x1xf32> to vector<16x1xf32>
    %19 = vector.broadcast %18 : vector<16x1xf32> to vector<16x512xf32>
    %20 = arith.select %17, %19, %15 : vector<16x512xi1>, vector<16x512xf32>
    %21 = tpu.transpose %20, [1, 0] : vector<16x512xf32> -> vector<512x16xf32>
    %22 = arith.index_cast %2 : i32 to index
    %c0_3 = arith.constant 0 : index
    %23 = vector.load %arg3[%22, %c0_3] : memref<512x16xf32, #tpu.memory_space<vmem>>, vector<512x16xf32>
    tpu.vector_store %arg3[%22, %c0_3], %21 {strides = array<i32>} : memref<512x16xf32, #tpu.memory_space<vmem>>, vector<512x16xf32>,
    %c1_i32 = arith.constant 1 : i32
    return
  }
  func.func @transform_0(%arg0: i32) -> (i32, i32) {
    %c0_i32 = arith.constant 0 : i32
    %c0_i32_0 = arith.constant 0 : i32
    %c0_i32_1 = arith.constant 0 : i32
    return %c0_i32, %c0_i32_0 : i32, i32
  }
  func.func @transform_1(%arg0: i32) -> (i32, i32) {
    %c0_i32 = arith.constant 0 : i32
    %c0_i32_0 = arith.constant 0 : i32
    return %c0_i32, %arg0 : i32, i32
  }
  func.func @transform_2(%arg0: i32) -> (i32, i32) {
    %c0_i32 = arith.constant 0 : i32
    %c0_i32_0 = arith.constant 0 : i32
    return %arg0, %c0_i32 : i32, i32
  }
}

</mosaic_0001>

<llo_original>
// kernel: tpu_custom_call.1
$region0: #{tpu_custom_call.1}
  #allocation0 [shape = 'u32[]', space=smem, size = 0x4, offset = 0x4, fixed_abs, tag = 'smem constant byte address 0x4 - core index']
  #allocation1 [shape = 'u32[72,128]{1,0:T(1,128)}', space=vmem, size = 0x9000, scoped, tag = 'internal scratch']
  %s0 = inlined_call_operand.vmem [shape: f32[16,1], index: 0, kind: input, shape index: {}]
  %s1 = inlined_call_operand.vmem [shape: f32[1,512], index: 1, kind: input, shape index: {}]
  %s2 = inlined_call_operand.vmem [shape: f32[512,16], index: 2, kind: output, shape index: {}]
  %s3 = sld [smem:[#allocation0]]
  $region18: #{tpu_custom_call.1} parent=0
    _
  %s5 = ssub.s32 1, %s3
  %s6 = scalar_select 0, %s5, %s3
  // Predicated region
  $region2: #{tpu_custom_call.1} parent=0 // pred_check
    _
  $region3: #{tpu_custom_call.1} parent=0 // pred_check_branch
    %8 = sbr.rel (0) target = $region5
  $region4: #{tpu_custom_call.1} parent=0 // pred_region
    _
  $region5: #{tpu_custom_call.1} parent=0 // pred_fallthru
    _
  // Predicated region
  $region6: #{tpu_custom_call.1} parent=0 // pred_check
    _
  $region7: #{tpu_custom_call.1} parent=0 // pred_check_branch
    %10 = sbr.rel (0) target = $region9
  $region8: #{tpu_custom_call.1} parent=0 // pred_region
    _
  $region9: #{tpu_custom_call.1} parent=0 // pred_fallthru
    _
  %v11 = vld [vmem:[%s0] sm:$0xff]
  %v12 = vld [vmem:[%s0 + $0x8] sm:$0xff]
  %v13 = vld [vmem:[%s1] sm:$0xf]
  %vm14 = vcmp.eq.f32.partialorder %v13, 0.0
  %v15 = vsel %vm14, 1.0, %v13
  %v16 = vrcp.pop %v15
  %v17 = vmul.f32 %v15, %v16
  %v18 = vsub.f32 1.0, %v17
  %v19 = vmul.f32 %v16, %v18
  %v20 = vadd.f32 %v16, %v19
  %vm21 = vweird.f32 %v15
  %vm22 = vweird.f32 %v16
  %vm23 = vmor %vm21, %vm22
  %v24 = vsel %vm23, %v16, %v20
  %v25 = vand.u32 2147483647, %v15
  %vm26 = vcmp.eq.f32.partialorder %v25, 8.507059e+37
  %v27 = vand.u32 %v15, 2147483648
  %v28 = vor.u32 1.1754944e-38, %v27
  %v29 = vsel %vm26, %v28, %v24
  %31 = vset.pattern.permute.xlu0 0
  %32 = vperm.xlu0 %31, %v11
  %v33 = vpop.permute.xlu0 %32
  %36 = vset.pattern.permute.xlu0 0
  %37 = vperm.xlu0 %36, %v12
  %v38 = vpop.permute.xlu0 %37
  %v41 = vperm.slane %v13, 0
  %v42 = vperm.slane %v13, 1
  %v43 = vperm.slane %v13, 2
  %v44 = vperm.slane %v13, 3
  %v49 = vmul.f32 %v33, %v41
  %v50 = vmul.f32 %v33, %v42
  %v51 = vmul.f32 %v33, %v43
  %v52 = vmul.f32 %v33, %v44
  %v53 = vmul.f32 %v38, %v41
  %v54 = vmul.f32 %v38, %v42
  %v55 = vmul.f32 %v38, %v43
  %v56 = vmul.f32 %v38, %v44
  %v57 = vand.u32 2147483647, %v49
  %vm58 = vcmp.le.f32.partialorder %v57, 0.7853982
  %vm59 = vcmp.lt.s32.totalorder %v49, 0
  %v60 = vand.u32 %v49, 2139095040
  %v61 = vshrl.u32 %v60, 23
  %v62 = vsub.s32 %v61, 127
  %v63 = vand.u32 2147483647, %v49
  %v64 = vand.u32 %v63, 8388607
  %v65 = vor.u32 %v64, 8388608
  %v66 = vsub.s32 0, %v65
  %v67 = vadd.s32 %v62, 1
  %vm68 = vcmp.gt.s32.totalorder %v67, 0
  %v69 = vsel %vm68, %v67, 0
  %v70 = vshrl.u32 %v69, 5
  %v71 = vand.u32 %v69, 31
  %v72 = vsub.s32 32, %v71
  %v73 = vshrl.u32 683565275, %v72
  %v74 = vshll.u32 683565275, %v71
  %v75 = vshrl.u32 2475754826, %v72
  %v76 = vor.u32 %v74, %v75
  %v77 = vshll.u32 2475754826, %v71
  %v78 = vshrl.u32 2131351028, %v72
  %v79 = vor.u32 %v77, %v78
  %v80 = vshll.u32 2131351028, %v71
  %v81 = vshrl.u32 2102212464, %v72
  %v82 = vor.u32 %v80, %v81
  %v83 = vshll.u32 2102212464, %v71
  %v84 = vshrl.u32 920167782, %v72
  %v85 = vor.u32 %v83, %v84
  %v86 = vshll.u32 920167782, %v71
  %v87 = vshrl.u32 1326507024, %v72
  %v88 = vor.u32 %v86, %v87
  %vm89 = vcmp.lt.s32.totalorder %v70, 1
  %vm90 = vcmp.lt.s32.totalorder %v70, 2
  %vm91 = vcmp.lt.s32.totalorder %v70, 3
  %vm92 = vcmp.lt.s32.totalorder %v70, 4
  %v93 = vsel %vm89, %v73, %v76
  %v94 = vsel %vm92, %v82, 2102212464
  %v95 = vsel %vm91, %v79, %v94
  %v96 = vsel %vm90, %v93, %v95
  %v97 = vsel %vm89, %v76, %v79
  %v98 = vsel %vm92, %v85, 920167782
  %v99 = vsel %vm91, %v82, %v98
  %v100 = vsel %vm90, %v97, %v99
  %v101 = vsel %vm89, %v79, %v82
  %v102 = vsel %vm92, %v88, 1326507024
  %v103 = vsel %vm91, %v85, %v102
  %v104 = vsel %vm90, %v101, %v103
  %v105 = vshll.u32 %v65, 8
  %v106 = vand.u32 %v105, 65535
  %v107 = vshrl.u32 %v105, 16
  %v108 = vand.u32 %v104, 65535
  %v109 = vshrl.u32 %v104, 16
  %v110 = vmul.u32 %v106, %v108
  %v111 = vmul.u32 %v106, %v109
  %v112 = vmul.u32 %v107, %v108
  %v113 = vmul.u32 %v107, %v109
  %v114 = vshll.u32 %v111, 16
  %v115 = vshrl.u32 %v111, 16
  %v116 = vshll.u32 %v112, 16
  %v117 = vshrl.u32 %v112, 16
  %vm118 = vc.u32 %v110, %v114
  %v119 = vsel %vm118, 1, 0
  %v120 = vadd.s32 %v110, %v114
  %v121 = vadd.s32 %v113, %v119
  %vm122 = vc.u32 %v120, %v116
  %v123 = vsel %vm122, 1, 0
  %v124 = vadd.s32 %v120, %v116
  %v125 = vadd.s32 %v121, %v123
  %v126 = vadd.s32 %v125, %v115
  %v127 = vadd.s32 %v126, %v117
  %v128 = vand.u32 %v105, 65535
  %v129 = vshrl.u32 %v105, 16
  %v130 = vand.u32 %v100, 65535
  %v131 = vshrl.u32 %v100, 16
  %v132 = vmul.u32 %v128, %v130
  %v133 = vmul.u32 %v128, %v131
  %v134 = vmul.u32 %v129, %v130
  %v135 = vmul.u32 %v129, %v131
  %v136 = vshll.u32 %v133, 16
  %v137 = vshrl.u32 %v133, 16
  %v138 = vshll.u32 %v134, 16
  %v139 = vshrl.u32 %v134, 16
  %vm140 = vc.u32 %v132, %v136
  %v141 = vsel %vm140, 1, 0
  %v142 = vadd.s32 %v132, %v136
  %v143 = vadd.s32 %v135, %v141
  %vm144 = vc.u32 %v142, %v138
  %v145 = vsel %vm144, 1, 0
  %v146 = vadd.s32 %v142, %v138
  %v147 = vadd.s32 %v143, %v145
  %v148 = vadd.s32 %v147, %v137
  %v149 = vadd.s32 %v148, %v139
  %v150 = vmul.u32 %v105, %v96
  %v151 = vadd.s32 %v127, %v146
  %vm152 = vc.u32 %v127, %v146
  %v153 = vadd.s32 %v149, 1
  %v154 = vsel %vm152, %v153, %v149
  %v155 = vadd.s32 %v150, %v154
  %v156 = vadd.s32 %v155, 536870912
  %v157 = vshrl.u32 %v156, 30
  %v158 = vshll.u32 %v157, 30
  %v159 = vsub.s32 %v155, %v158
  %vm160 = vcmp.lt.s32.totalorder %v159, 0
  %v161 = vsub.s32 0, %v159
  %v162 = vsel %vm160, %v161, %v159
  %v163 = vclz %v162
  %v164 = vsub.s32 %v163, 2
  %vm165 = vcmp.gt.s32.totalorder 0, %v164
  %v166 = vsel %vm165, 0, %v164
  %v167 = vsub.s32 32, %v166
  %v168 = vshll.u32 %v159, %v166
  %v169 = vshrl.u32 %v151, %v167
  %v170 = vor.u32 %v168, %v169
  %v171 = vsub.s32 4294967266, %v166
  %v172 = vadd.s32 %v171, 127
  %v173 = vshll.u32 %v172, 23
  %v174 = vor.u32 4788187, %v173
  %v175 = vand.u32 2147483647, %v174
  %v177 = vcvt.s32.f32 %v170
  %v178 = vmul.f32 %v177, %v175
  %v179 = vxor.u32 %v178, 2147483648
  %v180 = vsel %vm59, %v179, %v178
  %v181 = vsub.s32 4, %v157
  %v182 = vsel %vm59, %v181, %v157
  %v183 = vsel %vm58, %v49, %v180
  %v184 = vsel %vm58, 0, %v182
  %v185 = vmul.f32 %v183, %v183
  %v186 = vmul.f32 %v185, -0.001358992
  %v187 = vadd.f32 %v186, 0.041655596
  %v188 = vmul.f32 %v185, %v187
  %v189 = vadd.f32 %v188, -0.4999988
  %v190 = vmul.f32 %v185, %v189
  %v191 = vadd.f32 1.0, %v190
  %v192 = vmul.f32 %v183, %v183
  %v193 = vmul.f32 %v192, -0.00019511016
  %v194 = vadd.f32 %v193, 0.008332121
  %v195 = vmul.f32 %v192, %v194
  %v196 = vadd.f32 %v195, -0.16666654
  %v197 = vmul.f32 %v192, %v196
  %v198 = vadd.f32 %v197, 1.0
  %v199 = vmul.f32 %v198, %v183
  %vm200 = vweird.f32 %v49
  %v201 = vadd.s32 %v184, 3
  %v202 = vand.u32 %v201, 3
  %vm203 = vcmp.lt.s32.totalorder %v202, 2
  %vm204 = vcmp.eq.s32.totalorder %v202, 0
  %v205 = vxor.u32 %v199, 2147483648
  %v206 = vsel %vm204, %v191, %v205
  %vm207 = vcmp.eq.s32.totalorder %v202, 2
  %v208 = vxor.u32 %v191, 2147483648
  %v209 = vsel %vm207, %v208, %v199
  %v210 = vsel %vm203, %v206, %v209
  %v211 = vsel %vm200, nan, %v210
  %v212 = vand.u32 2147483647, %v50
  %vm213 = vcmp.le.f32.partialorder %v212, 0.7853982
  %vm214 = vcmp.lt.s32.totalorder %v50, 0
  %v215 = vand.u32 %v50, 2139095040
  %v216 = vshrl.u32 %v215, 23
  %v217 = vsub.s32 %v216, 127
  %v218 = vand.u32 2147483647, %v50
  %v219 = vand.u32 %v218, 8388607
  %v220 = vor.u32 %v219, 8388608
  %v221 = vsub.s32 0, %v220
  %v222 = vadd.s32 %v217, 1
  %vm223 = vcmp.gt.s32.totalorder %v222, 0
  %v224 = vsel %vm223, %v222, 0
  %v225 = vshrl.u32 %v224, 5
  %v226 = vand.u32 %v224, 31
  %v227 = vsub.s32 32, %v226
  %v228 = vshrl.u32 683565275, %v227
  %v229 = vshll.u32 683565275, %v226
  %v230 = vshrl.u32 2475754826, %v227
  %v231 = vor.u32 %v229, %v230
  %v232 = vshll.u32 2475754826, %v226
  %v233 = vshrl.u32 2131351028, %v227
  %v234 = vor.u32 %v232, %v233
  %v235 = vshll.u32 2131351028, %v226
  %v236 = vshrl.u32 2102212464, %v227
  %v237 = vor.u32 %v235, %v236
  %v238 = vshll.u32 2102212464, %v226
  %v239 = vshrl.u32 920167782, %v227
  %v240 = vor.u32 %v238, %v239
  %v241 = vshll.u32 920167782, %v226
  %v242 = vshrl.u32 1326507024, %v227
  %v243 = vor.u32 %v241, %v242
  %vm244 = vcmp.lt.s32.totalorder %v225, 1
  %vm245 = vcmp.lt.s32.totalorder %v225, 2
  %vm246 = vcmp.lt.s32.totalorder %v225, 3
  %vm247 = vcmp.lt.s32.totalorder %v225, 4
  %v248 = vsel %vm244, %v228, %v231
  %v249 = vsel %vm247, %v237, 2102212464
  %v250 = vsel %vm246, %v234, %v249
  %v251 = vsel %vm245, %v248, %v250
  %v252 = vsel %vm244, %v231, %v234
  %v253 = vsel %vm247, %v240, 920167782
  %v254 = vsel %vm246, %v237, %v253
  %v255 = vsel %vm245, %v252, %v254
  %v256 = vsel %vm244, %v234, %v237
  %v257 = vsel %vm247, %v243, 1326507024
  %v258 = vsel %vm246, %v240, %v257
  %v259 = vsel %vm245, %v256, %v258
  %v260 = vshll.u32 %v220, 8
  %v261 = vand.u32 %v260, 65535
  %v262 = vshrl.u32 %v260, 16
  %v263 = vand.u32 %v259, 65535
  %v264 = vshrl.u32 %v259, 16
  %v265 = vmul.u32 %v261, %v263
  %v266 = vmul.u32 %v261, %v264
  %v267 = vmul.u32 %v262, %v263
  %v268 = vmul.u32 %v262, %v264
  %v269 = vshll.u32 %v266, 16
  %v270 = vshrl.u32 %v266, 16
  %v271 = vshll.u32 %v267, 16
  %v272 = vshrl.u32 %v267, 16
  %vm273 = vc.u32 %v265, %v269
  %v274 = vsel %vm273, 1, 0
  %v275 = vadd.s32 %v265, %v269
  %v276 = vadd.s32 %v268, %v274
  %vm277 = vc.u32 %v275, %v271
  %v278 = vsel %vm277, 1, 0
  %v279 = vadd.s32 %v275, %v271
  %v280 = vadd.s32 %v276, %v278
  %v281 = vadd.s32 %v280, %v270
  %v282 = vadd.s32 %v281, %v272
  %v283 = vand.u32 %v260, 65535
  %v284 = vshrl.u32 %v260, 16
  %v285 = vand.u32 %v255, 65535
  %v286 = vshrl.u32 %v255, 16
  %v287 = vmul.u32 %v283, %v285
  %v288 = vmul.u32 %v283, %v286
  %v289 = vmul.u32 %v284, %v285
  %v290 = vmul.u32 %v284, %v286
  %v291 = vshll.u32 %v288, 16
  %v292 = vshrl.u32 %v288, 16
  %v293 = vshll.u32 %v289, 16
  %v294 = vshrl.u32 %v289, 16
  %vm295 = vc.u32 %v287, %v291
  %v296 = vsel %vm295, 1, 0
  %v297 = vadd.s32 %v287, %v291
  %v298 = vadd.s32 %v290, %v296
  %vm299 = vc.u32 %v297, %v293
  %v300 = vsel %vm299, 1, 0
  %v301 = vadd.s32 %v297, %v293
  %v302 = vadd.s32 %v298, %v300
  %v303 = vadd.s32 %v302, %v292
  %v304 = vadd.s32 %v303, %v294
  %v305 = vmul.u32 %v260, %v251
  %v306 = vadd.s32 %v282, %v301
  %vm307 = vc.u32 %v282, %v301
  %v308 = vadd.s32 %v304, 1
  %v309 = vsel %vm307, %v308, %v304
  %v310 = vadd.s32 %v305, %v309
  %v311 = vadd.s32 %v310, 536870912
  %v312 = vshrl.u32 %v311, 30
  %v313 = vshll.u32 %v312, 30
  %v314 = vsub.s32 %v310, %v313
  %vm315 = vcmp.lt.s32.totalorder %v314, 0
  %v316 = vsub.s32 0, %v314
  %v317 = vsel %vm315, %v316, %v314
  %v318 = vclz %v317
  %v319 = vsub.s32 %v318, 2
  %vm320 = vcmp.gt.s32.totalorder 0, %v319
  %v321 = vsel %vm320, 0, %v319
  %v322 = vsub.s32 32, %v321
  %v323 = vshll.u32 %v314, %v321
  %v324 = vshrl.u32 %v306, %v322
  %v325 = vor.u32 %v323, %v324
  %v326 = vsub.s32 4294967266, %v321
  %v327 = vadd.s32 %v326, 127
  %v328 = vshll.u32 %v327, 23
  %v329 = vor.u32 4788187, %v328
  %v330 = vand.u32 2147483647, %v329
  %v332 = vcvt.s32.f32 %v325
  %v333 = vmul.f32 %v332, %v330
  %v334 = vxor.u32 %v333, 2147483648
  %v335 = vsel %vm214, %v334, %v333
  %v336 = vsub.s32 4, %v312
  %v337 = vsel %vm214, %v336, %v312
  %v338 = vsel %vm213, %v50, %v335
  %v339 = vsel %vm213, 0, %v337
  %v340 = vmul.f32 %v338, %v338
  %v341 = vmul.f32 %v340, -0.001358992
  %v342 = vadd.f32 %v341, 0.041655596
  %v343 = vmul.f32 %v340, %v342
  %v344 = vadd.f32 %v343, -0.4999988
  %v345 = vmul.f32 %v340, %v344
  %v346 = vadd.f32 1.0, %v345
  %v347 = vmul.f32 %v338, %v338
  %v348 = vmul.f32 %v347, -0.00019511016
  %v349 = vadd.f32 %v348, 0.008332121
  %v350 = vmul.f32 %v347, %v349
  %v351 = vadd.f32 %v350, -0.16666654
  %v352 = vmul.f32 %v347, %v351
  %v353 = vadd.f32 %v352, 1.0
  %v354 = vmul.f32 %v353, %v338
  %vm355 = vweird.f32 %v50
  %v356 = vadd.s32 %v339, 3
  %v357 = vand.u32 %v356, 3
  %vm358 = vcmp.lt.s32.totalorder %v357, 2
  %vm359 = vcmp.eq.s32.totalorder %v357, 0
  %v360 = vxor.u32 %v354, 2147483648
  %v361 = vsel %vm359, %v346, %v360
  %vm362 = vcmp.eq.s32.totalorder %v357, 2
  %v363 = vxor.u32 %v346, 2147483648
  %v364 = vsel %vm362, %v363, %v354
  %v365 = vsel %vm358, %v361, %v364
  %v366 = vsel %vm355, nan, %v365
  %v367 = vand.u32 2147483647, %v51
  %vm368 = vcmp.le.f32.partialorder %v367, 0.7853982
  %vm369 = vcmp.lt.s32.totalorder %v51, 0
  %v370 = vand.u32 %v51, 2139095040
  %v371 = vshrl.u32 %v370, 23
  %v372 = vsub.s32 %v371, 127
  %v373 = vand.u32 2147483647, %v51
  %v374 = vand.u32 %v373, 8388607
  %v375 = vor.u32 %v374, 8388608
  %v376 = vsub.s32 0, %v375
  %v377 = vadd.s32 %v372, 1
  %vm378 = vcmp.gt.s32.totalorder %v377, 0
  %v379 = vsel %vm378, %v377, 0
  %v380 = vshrl.u32 %v379, 5
  %v381 = vand.u32 %v379, 31
  %v382 = vsub.s32 32, %v381
  %v383 = vshrl.u32 683565275, %v382
  %v384 = vshll.u32 683565275, %v381
  %v385 = vshrl.u32 2475754826, %v382
  %v386 = vor.u32 %v384, %v385
  %v387 = vshll.u32 2475754826, %v381
  %v388 = vshrl.u32 2131351028, %v382
  %v389 = vor.u32 %v387, %v388
  %v390 = vshll.u32 2131351028, %v381
  %v391 = vshrl.u32 2102212464, %v382
  %v392 = vor.u32 %v390, %v391
  %v393 = vshll.u32 2102212464, %v381
  %v394 = vshrl.u32 920167782, %v382
  %v395 = vor.u32 %v393, %v394
  %v396 = vshll.u32 920167782, %v381
  %v397 = vshrl.u32 1326507024, %v382
  %v398 = vor.u32 %v396, %v397
  %vm399 = vcmp.lt.s32.totalorder %v380, 1
  %vm400 = vcmp.lt.s32.totalorder %v380, 2
  %vm401 = vcmp.lt.s32.totalorder %v380, 3
  %vm402 = vcmp.lt.s32.totalorder %v380, 4
  %v403 = vsel %vm399, %v383, %v386
  %v404 = vsel %vm402, %v392, 2102212464
  %v405 = vsel %vm401, %v389, %v404
  %v406 = vsel %vm400, %v403, %v405
  %v407 = vsel %vm399, %v386, %v389
  %v408 = vsel %vm402, %v395, 920167782
  %v409 = vsel %vm401, %v392, %v408
  %v410 = vsel %vm400, %v407, %v409
  %v411 = vsel %vm399, %v389, %v392
  %v412 = vsel %vm402, %v398, 1326507024
  %v413 = vsel %vm401, %v395, %v412
  %v414 = vsel %vm400, %v411, %v413
  %v415 = vshll.u32 %v375, 8
  %v416 = vand.u32 %v415, 65535
  %v417 = vshrl.u32 %v415, 16
  %v418 = vand.u32 %v414, 65535
  %v419 = vshrl.u32 %v414, 16
  %v420 = vmul.u32 %v416, %v418
  %v421 = vmul.u32 %v416, %v419
  %v422 = vmul.u32 %v417, %v418
  %v423 = vmul.u32 %v417, %v419
  %v424 = vshll.u32 %v421, 16
  %v425 = vshrl.u32 %v421, 16
  %v426 = vshll.u32 %v422, 16
  %v427 = vshrl.u32 %v422, 16
  %vm428 = vc.u32 %v420, %v424
  %v429 = vsel %vm428, 1, 0
  %v430 = vadd.s32 %v420, %v424
  %v431 = vadd.s32 %v423, %v429
  %vm432 = vc.u32 %v430, %v426
  %v433 = vsel %vm432, 1, 0
  %v434 = vadd.s32 %v430, %v426
  %v435 = vadd.s32 %v431, %v433
  %v436 = vadd.s32 %v435, %v425
  %v437 = vadd.s32 %v436, %v427
  %v438 = vand.u32 %v415, 65535
  %v439 = vshrl.u32 %v415, 16
  %v440 = vand.u32 %v410, 65535
  %v441 = vshrl.u32 %v410, 16
  %v442 = vmul.u32 %v438, %v440
  %v443 = vmul.u32 %v438, %v441
  %v444 = vmul.u32 %v439, %v440
  %v445 = vmul.u32 %v439, %v441
  %v446 = vshll.u32 %v443, 16
  %v447 = vshrl.u32 %v443, 16
  %v448 = vshll.u32 %v444, 16
  %v449 = vshrl.u32 %v444, 16
  %vm450 = vc.u32 %v442, %v446
  %v451 = vsel %vm450, 1, 0
  %v452 = vadd.s32 %v442, %v446
  %v453 = vadd.s32 %v445, %v451
  %vm454 = vc.u32 %v452, %v448
  %v455 = vsel %vm454, 1, 0
  %v456 = vadd.s32 %v452, %v448
  %v457 = vadd.s32 %v453, %v455
  %v458 = vadd.s32 %v457, %v447
  %v459 = vadd.s32 %v458, %v449
  %v460 = vmul.u32 %v415, %v406
  %v461 = vadd.s32 %v437, %v456
  %vm462 = vc.u32 %v437, %v456
  %v463 = vadd.s32 %v459, 1
  %v464 = vsel %vm462, %v463, %v459
  %v465 = vadd.s32 %v460, %v464
  %v466 = vadd.s32 %v465, 536870912
  %v467 = vshrl.u32 %v466, 30
  %v468 = vshll.u32 %v467, 30
  %v469 = vsub.s32 %v465, %v468
  %vm470 = vcmp.lt.s32.totalorder %v469, 0
  %v471 = vsub.s32 0, %v469
  %v472 = vsel %vm470, %v471, %v469
  %v473 = vclz %v472
  %v474 = vsub.s32 %v473, 2
  %vm475 = vcmp.gt.s32.totalorder 0, %v474
  %v476 = vsel %vm475, 0, %v474
  %v477 = vsub.s32 32, %v476
  %v478 = vshll.u32 %v469, %v476
  %v479 = vshrl.u32 %v461, %v477
  %v480 = vor.u32 %v478, %v479
  %v481 = vsub.s32 4294967266, %v476
  %v482 = vadd.s32 %v481, 127
  %v483 = vshll.u32 %v482, 23
  %v484 = vor.u32 4788187, %v483
  %v485 = vand.u32 2147483647, %v484
  %v487 = vcvt.s32.f32 %v480
  %v488 = vmul.f32 %v487, %v485
  %v489 = vxor.u32 %v488, 2147483648
  %v490 = vsel %vm369, %v489, %v488
  %v491 = vsub.s32 4, %v467
  %v492 = vsel %vm369, %v491, %v467
  %v493 = vsel %vm368, %v51, %v490
  %v494 = vsel %vm368, 0, %v492
  %v495 = vmul.f32 %v493, %v493
  %v496 = vmul.f32 %v495, -0.001358992
  %v497 = vadd.f32 %v496, 0.041655596
  %v498 = vmul.f32 %v495, %v497
  %v499 = vadd.f32 %v498, -0.4999988
  %v500 = vmul.f32 %v495, %v499
  %v501 = vadd.f32 1.0, %v500
  %v502 = vmul.f32 %v493, %v493
  %v503 = vmul.f32 %v502, -0.00019511016
  %v504 = vadd.f32 %v503, 0.008332121
  %v505 = vmul.f32 %v502, %v504
  %v506 = vadd.f32 %v505, -0.16666654
  %v507 = vmul.f32 %v502, %v506
  %v508 = vadd.f32 %v507, 1.0
  %v509 = vmul.f32 %v508, %v493
  %vm510 = vweird.f32 %v51
  %v511 = vadd.s32 %v494, 3
  %v512 = vand.u32 %v511, 3
  %vm513 = vcmp.lt.s32.totalorder %v512, 2
  %vm514 = vcmp.eq.s32.totalorder %v512, 0
  %v515 = vxor.u32 %v509, 2147483648
  %v516 = vsel %vm514, %v501, %v515
  %vm517 = vcmp.eq.s32.totalorder %v512, 2
  %v518 = vxor.u32 %v501, 2147483648
  %v519 = vsel %vm517, %v518, %v509
  %v520 = vsel %vm513, %v516, %v519
  %v521 = vsel %vm510, nan, %v520
  %v522 = vand.u32 2147483647, %v52
  %vm523 = vcmp.le.f32.partialorder %v522, 0.7853982
  %vm524 = vcmp.lt.s32.totalorder %v52, 0
  %v525 = vand.u32 %v52, 2139095040
  %v526 = vshrl.u32 %v525, 23
  %v527 = vsub.s32 %v526, 127
  %v528 = vand.u32 2147483647, %v52
  %v529 = vand.u32 %v528, 8388607
  %v530 = vor.u32 %v529, 8388608
  %v531 = vsub.s32 0, %v530
  %v532 = vadd.s32 %v527, 1
  %vm533 = vcmp.gt.s32.totalorder %v532, 0
  %v534 = vsel %vm533, %v532, 0
  %v535 = vshrl.u32 %v534, 5
  %v536 = vand.u32 %v534, 31
  %v537 = vsub.s32 32, %v536
  %v538 = vshrl.u32 683565275, %v537
  %v539 = vshll.u32 683565275, %v536
  %v540 = vshrl.u32 2475754826, %v537
  %v541 = vor.u32 %v539, %v540
  %v542 = vshll.u32 2475754826, %v536
  %v543 = vshrl.u32 2131351028, %v537
  %v544 = vor.u32 %v542, %v543
  %v545 = vshll.u32 2131351028, %v536
  %v546 = vshrl.u32 2102212464, %v537
  %v547 = vor.u32 %v545, %v546
  %v548 = vshll.u32 2102212464, %v536
  %v549 = vshrl.u32 920167782, %v537
  %v550 = vor.u32 %v548, %v549
  %v551 = vshll.u32 920167782, %v536
  %v552 = vshrl.u32 1326507024, %v537
  %v553 = vor.u32 %v551, %v552
  %vm554 = vcmp.lt.s32.totalorder %v535, 1
  %vm555 = vcmp.lt.s32.totalorder %v535, 2
  %vm556 = vcmp.lt.s32.totalorder %v535, 3
  %vm557 = vcmp.lt.s32.totalorder %v535, 4
  %v558 = vsel %vm554, %v538, %v541
  %v559 = vsel %vm557, %v547, 2102212464
  %v560 = vsel %vm556, %v544, %v559
  %v561 = vsel %vm555, %v558, %v560
  %v562 = vsel %vm554, %v541, %v544
  %v563 = vsel %vm557, %v550, 920167782
  %v564 = vsel %vm556, %v547, %v563
  %v565 = vsel %vm555, %v562, %v564
  %v566 = vsel %vm554, %v544, %v547
  %v567 = vsel %vm557, %v553, 1326507024
  %v568 = vsel %vm556, %v550, %v567
  %v569 = vsel %vm555, %v566, %v568
  %v570 = vshll.u32 %v530, 8
  %v571 = vand.u32 %v570, 65535
  %v572 = vshrl.u32 %v570, 16
  %v573 = vand.u32 %v569, 65535
  %v574 = vshrl.u32 %v569, 16
  %v575 = vmul.u32 %v571, %v573
  %v576 = vmul.u32 %v571, %v574
  %v577 = vmul.u32 %v572, %v573
  %v578 = vmul.u32 %v572, %v574
  %v579 = vshll.u32 %v576, 16
  %v580 = vshrl.u32 %v576, 16
  %v581 = vshll.u32 %v577, 16
  %v582 = vshrl.u32 %v577, 16
  %vm583 = vc.u32 %v575, %v579
  %v584 = vsel %vm583, 1, 0
  %v585 = vadd.s32 %v575, %v579
  %v586 = vadd.s32 %v578, %v584
  %vm587 = vc.u32 %v585, %v581
  %v588 = vsel %vm587, 1, 0
  %v589 = vadd.s32 %v585, %v581
  %v590 = vadd.s32 %v586, %v588
  %v591 = vadd.s32 %v590, %v580
  %v592 = vadd.s32 %v591, %v582
  %v593 = vand.u32 %v570, 65535
  %v594 = vshrl.u32 %v570, 16
  %v595 = vand.u32 %v565, 65535
  %v596 = vshrl.u32 %v565, 16
  %v597 = vmul.u32 %v593, %v595
  %v598 = vmul.u32 %v593, %v596
  %v599 = vmul.u32 %v594, %v595
  %v600 = vmul.u32 %v594, %v596
  %v601 = vshll.u32 %v598, 16
  %v602 = vshrl.u32 %v598, 16
  %v603 = vshll.u32 %v599, 16
  %v604 = vshrl.u32 %v599, 16
  %vm605 = vc.u32 %v597, %v601
  %v606 = vsel %vm605, 1, 0
  %v607 = vadd.s32 %v597, %v601
  %v608 = vadd.s32 %v600, %v606
  %vm609 = vc.u32 %v607, %v603
  %v610 = vsel %vm609, 1, 0
  %v611 = vadd.s32 %v607, %v603
  %v612 = vadd.s32 %v608, %v610
  %v613 = vadd.s32 %v612, %v602
  %v614 = vadd.s32 %v613, %v604
  %v615 = vmul.u32 %v570, %v561
  %v616 = vadd.s32 %v592, %v611
  %vm617 = vc.u32 %v592, %v611
  %v618 = vadd.s32 %v614, 1
  %v619 = vsel %vm617, %v618, %v614
  %v620 = vadd.s32 %v615, %v619
  %v621 = vadd.s32 %v620, 536870912
  %v622 = vshrl.u32 %v621, 30
  %v623 = vshll.u32 %v622, 30
  %v624 = vsub.s32 %v620, %v623
  %vm625 = vcmp.lt.s32.totalorder %v624, 0
  %v626 = vsub.s32 0, %v624
  %v627 = vsel %vm625, %v626, %v624
  %v628 = vclz %v627
  %v629 = vsub.s32 %v628, 2
  %vm630 = vcmp.gt.s32.totalorder 0, %v629
  %v631 = vsel %vm630, 0, %v629
  %v632 = vsub.s32 32, %v631
  %v633 = vshll.u32 %v624, %v631
  %v634 = vshrl.u32 %v616, %v632
  %v635 = vor.u32 %v633, %v634
  %v636 = vsub.s32 4294967266, %v631
  %v637 = vadd.s32 %v636, 127
  %v638 = vshll.u32 %v637, 23
  %v639 = vor.u32 4788187, %v638
  %v640 = vand.u32 2147483647, %v639
  %v642 = vcvt.s32.f32 %v635
  %v643 = vmul.f32 %v642, %v640
  %v644 = vxor.u32 %v643, 2147483648
  %v645 = vsel %vm524, %v644, %v643
  %v646 = vsub.s32 4, %v622
  %v647 = vsel %vm524, %v646, %v622
  %v648 = vsel %vm523, %v52, %v645
  %v649 = vsel %vm523, 0, %v647
  %v650 = vmul.f32 %v648, %v648
  %v651 = vmul.f32 %v650, -0.001358992
  %v652 = vadd.f32 %v651, 0.041655596
  %v653 = vmul.f32 %v650, %v652
  %v654 = vadd.f32 %v653, -0.4999988
  %v655 = vmul.f32 %v650, %v654
  %v656 = vadd.f32 1.0, %v655
  %v657 = vmul.f32 %v648, %v648
  %v658 = vmul.f32 %v657, -0.00019511016
  %v659 = vadd.f32 %v658, 0.008332121
  %v660 = vmul.f32 %v657, %v659
  %v661 = vadd.f32 %v660, -0.16666654
  %v662 = vmul.f32 %v657, %v661
  %v663 = vadd.f32 %v662, 1.0
  %v664 = vmul.f32 %v663, %v648
  %vm665 = vweird.f32 %v52
  %v666 = vadd.s32 %v649, 3
  %v667 = vand.u32 %v666, 3
  %vm668 = vcmp.lt.s32.totalorder %v667, 2
  %vm669 = vcmp.eq.s32.totalorder %v667, 0
  %v670 = vxor.u32 %v664, 2147483648
  %v671 = vsel %vm669, %v656, %v670
  %vm672 = vcmp.eq.s32.totalorder %v667, 2
  %v673 = vxor.u32 %v656, 2147483648
  %v674 = vsel %vm672, %v673, %v664
  %v675 = vsel %vm668, %v671, %v674
  %v676 = vsel %vm665, nan, %v675
  %v677 = vand.u32 2147483647, %v53
  %vm678 = vcmp.le.f32.partialorder %v677, 0.7853982
  %vm679 = vcmp.lt.s32.totalorder %v53, 0
  %v680 = vand.u32 %v53, 2139095040
  %v681 = vshrl.u32 %v680, 23
  %v682 = vsub.s32 %v681, 127
  %v683 = vand.u32 2147483647, %v53
  %v684 = vand.u32 %v683, 8388607
  %v685 = vor.u32 %v684, 8388608
  %v686 = vsub.s32 0, %v685
  %v687 = vadd.s32 %v682, 1
  %vm688 = vcmp.gt.s32.totalorder %v687, 0
  %v689 = vsel %vm688, %v687, 0
  %v690 = vshrl.u32 %v689, 5
  %v691 = vand.u32 %v689, 31
  %v692 = vsub.s32 32, %v691
  %v693 = vshrl.u32 683565275, %v692
  %v694 = vshll.u32 683565275, %v691
  %v695 = vshrl.u32 2475754826, %v692
  %v696 = vor.u32 %v694, %v695
  %v697 = vshll.u32 2475754826, %v691
  %v698 = vshrl.u32 2131351028, %v692
  %v699 = vor.u32 %v697, %v698
  %v700 = vshll.u32 2131351028, %v691
  %v701 = vshrl.u32 2102212464, %v692
  %v702 = vor.u32 %v700, %v701
  %v703 = vshll.u32 2102212464, %v691
  %v704 = vshrl.u32 920167782, %v692
  %v705 = vor.u32 %v703, %v704
  %v706 = vshll.u32 920167782, %v691
  %v707 = vshrl.u32 1326507024, %v692
  %v708 = vor.u32 %v706, %v707
  %vm709 = vcmp.lt.s32.totalorder %v690, 1
  %vm710 = vcmp.lt.s32.totalorder %v690, 2
  %vm711 = vcmp.lt.s32.totalorder %v690, 3
  %vm712 = vcmp.lt.s32.totalorder %v690, 4
  %v713 = vsel %vm709, %v693, %v696
  %v714 = vsel %vm712, %v702, 2102212464
  %v715 = vsel %vm711, %v699, %v714
  %v716 = vsel %vm710, %v713, %v715
  %v717 = vsel %vm709, %v696, %v699
  %v718 = vsel %vm712, %v705, 920167782
  %v719 = vsel %vm711, %v702, %v718
  %v720 = vsel %vm710, %v717, %v719
  %v721 = vsel %vm709, %v699, %v702
  %v722 = vsel %vm712, %v708, 1326507024
  %v723 = vsel %vm711, %v705, %v722
  %v724 = vsel %vm710, %v721, %v723
  %v725 = vshll.u32 %v685, 8
  %v726 = vand.u32 %v725, 65535
  %v727 = vshrl.u32 %v725, 16
  %v728 = vand.u32 %v724, 65535
  %v729 = vshrl.u32 %v724, 16
  %v730 = vmul.u32 %v726, %v728
  %v731 = vmul.u32 %v726, %v729
  %v732 = vmul.u32 %v727, %v728
  %v733 = vmul.u32 %v727, %v729
  %v734 = vshll.u32 %v731, 16
  %v735 = vshrl.u32 %v731, 16
  %v736 = vshll.u32 %v732, 16
  %v737 = vshrl.u32 %v732, 16
  %vm738 = vc.u32 %v730, %v734
  %v739 = vsel %vm738, 1, 0
  %v740 = vadd.s32 %v730, %v734
  %v741 = vadd.s32 %v733, %v739
  %vm742 = vc.u32 %v740, %v736
  %v743 = vsel %vm742, 1, 0
  %v744 = vadd.s32 %v740, %v736
  %v745 = vadd.s32 %v741, %v743
  %v746 = vadd.s32 %v745, %v735
  %v747 = vadd.s32 %v746, %v737
  %v748 = vand.u32 %v725, 65535
  %v749 = vshrl.u32 %v725, 16
  %v750 = vand.u32 %v720, 65535
  %v751 = vshrl.u32 %v720, 16
  %v752 = vmul.u32 %v748, %v750
  %v753 = vmul.u32 %v748, %v751
  %v754 = vmul.u32 %v749, %v750
  %v755 = vmul.u32 %v749, %v751
  %v756 = vshll.u32 %v753, 16
  %v757 = vshrl.u32 %v753, 16
  %v758 = vshll.u32 %v754, 16
  %v759 = vshrl.u32 %v754, 16
  %vm760 = vc.u32 %v752, %v756
  %v761 = vsel %vm760, 1, 0
  %v762 = vadd.s32 %v752, %v756
  %v763 = vadd.s32 %v755, %v761
  %vm764 = vc.u32 %v762, %v758
  %v765 = vsel %vm764, 1, 0
  %v766 = vadd.s32 %v762, %v758
  %v767 = vadd.s32 %v763, %v765
  %v768 = vadd.s32 %v767, %v757
  %v769 = vadd.s32 %v768, %v759
  %v770 = vmul.u32 %v725, %v716
  %v771 = vadd.s32 %v747, %v766
  %vm772 = vc.u32 %v747, %v766
  %v773 = vadd.s32 %v769, 1
  %v774 = vsel %vm772, %v773, %v769
  %v775 = vadd.s32 %v770, %v774
  %v776 = vadd.s32 %v775, 536870912
  %v777 = vshrl.u32 %v776, 30
  %v778 = vshll.u32 %v777, 30
  %v779 = vsub.s32 %v775, %v778
  %vm780 = vcmp.lt.s32.totalorder %v779, 0
  %v781 = vsub.s32 0, %v779
  %v782 = vsel %vm780, %v781, %v779
  %v783 = vclz %v782
  %v784 = vsub.s32 %v783, 2
  %vm785 = vcmp.gt.s32.totalorder 0, %v784
  %v786 = vsel %vm785, 0, %v784
  %v787 = vsub.s32 32, %v786
  %v788 = vshll.u32 %v779, %v786
  %v789 = vshrl.u32 %v771, %v787
  %v790 = vor.u32 %v788, %v789
  %v791 = vsub.s32 4294967266, %v786
  %v792 = vadd.s32 %v791, 127
  %v793 = vshll.u32 %v792, 23
  %v794 = vor.u32 4788187, %v793
  %v795 = vand.u32 2147483647, %v794
  %v797 = vcvt.s32.f32 %v790
  %v798 = vmul.f32 %v797, %v795
  %v799 = vxor.u32 %v798, 2147483648
  %v800 = vsel %vm679, %v799, %v798
  %v801 = vsub.s32 4, %v777
  %v802 = vsel %vm679, %v801, %v777
  %v803 = vsel %vm678, %v53, %v800
  %v804 = vsel %vm678, 0, %v802
  %v805 = vmul.f32 %v803, %v803
  %v806 = vmul.f32 %v805, -0.001358992
  %v807 = vadd.f32 %v806, 0.041655596
  %v808 = vmul.f32 %v805, %v807
  %v809 = vadd.f32 %v808, -0.4999988
  %v810 = vmul.f32 %v805, %v809
  %v811 = vadd.f32 1.0, %v810
  %v812 = vmul.f32 %v803, %v803
  %v813 = vmul.f32 %v812, -0.00019511016
  %v814 = vadd.f32 %v813, 0.008332121
  %v815 = vmul.f32 %v812, %v814
  %v816 = vadd.f32 %v815, -0.16666654
  %v817 = vmul.f32 %v812, %v816
  %v818 = vadd.f32 %v817, 1.0
  %v819 = vmul.f32 %v818, %v803
  %vm820 = vweird.f32 %v53
  %v821 = vadd.s32 %v804, 3
  %v822 = vand.u32 %v821, 3
  %vm823 = vcmp.lt.s32.totalorder %v822, 2
  %vm824 = vcmp.eq.s32.totalorder %v822, 0
  %v825 = vxor.u32 %v819, 2147483648
  %v826 = vsel %vm824, %v811, %v825
  %vm827 = vcmp.eq.s32.totalorder %v822, 2
  %v828 = vxor.u32 %v811, 2147483648
  %v829 = vsel %vm827, %v828, %v819
  %v830 = vsel %vm823, %v826, %v829
  %v831 = vsel %vm820, nan, %v830
  %v832 = vand.u32 2147483647, %v54
  %vm833 = vcmp.le.f32.partialorder %v832, 0.7853982
  %vm834 = vcmp.lt.s32.totalorder %v54, 0
  %v835 = vand.u32 %v54, 2139095040
  %v836 = vshrl.u32 %v835, 23
  %v837 = vsub.s32 %v836, 127
  %v838 = vand.u32 2147483647, %v54
  %v839 = vand.u32 %v838, 8388607
  %v840 = vor.u32 %v839, 8388608
  %v841 = vsub.s32 0, %v840
  %v842 = vadd.s32 %v837, 1
  %vm843 = vcmp.gt.s32.totalorder %v842, 0
  %v844 = vsel %vm843, %v842, 0
  %v845 = vshrl.u32 %v844, 5
  %v846 = vand.u32 %v844, 31
  %v847 = vsub.s32 32, %v846
  %v848 = vshrl.u32 683565275, %v847
  %v849 = vshll.u32 683565275, %v846
  %v850 = vshrl.u32 2475754826, %v847
  %v851 = vor.u32 %v849, %v850
  %v852 = vshll.u32 2475754826, %v846
  %v853 = vshrl.u32 2131351028, %v847
  %v854 = vor.u32 %v852, %v853
  %v855 = vshll.u32 2131351028, %v846
  %v856 = vshrl.u32 2102212464, %v847
  %v857 = vor.u32 %v855, %v856
  %v858 = vshll.u32 2102212464, %v846
  %v859 = vshrl.u32 920167782, %v847
  %v860 = vor.u32 %v858, %v859
  %v861 = vshll.u32 920167782, %v846
  %v862 = vshrl.u32 1326507024, %v847
  %v863 = vor.u32 %v861, %v862
  %vm864 = vcmp.lt.s32.totalorder %v845, 1
  %vm865 = vcmp.lt.s32.totalorder %v845, 2
  %vm866 = vcmp.lt.s32.totalorder %v845, 3
  %vm867 = vcmp.lt.s32.totalorder %v845, 4
  %v868 = vsel %vm864, %v848, %v851
  %v869 = vsel %vm867, %v857, 2102212464
  %v870 = vsel %vm866, %v854, %v869
  %v871 = vsel %vm865, %v868, %v870
  %v872 = vsel %vm864, %v851, %v854
  %v873 = vsel %vm867, %v860, 920167782
  %v874 = vsel %vm866, %v857, %v873
  %v875 = vsel %vm865, %v872, %v874
  %v876 = vsel %vm864, %v854, %v857
  %v877 = vsel %vm867, %v863, 1326507024
  %v878 = vsel %vm866, %v860, %v877
  %v879 = vsel %vm865, %v876, %v878
  %v880 = vshll.u32 %v840, 8
  %v881 = vand.u32 %v880, 65535
  %v882 = vshrl.u32 %v880, 16
  %v883 = vand.u32 %v879, 65535
  %v884 = vshrl.u32 %v879, 16
  %v885 = vmul.u32 %v881, %v883
  %v886 = vmul.u32 %v881, %v884
  %v887 = vmul.u32 %v882, %v883
  %v888 = vmul.u32 %v882, %v884
  %v889 = vshll.u32 %v886, 16
  %v890 = vshrl.u32 %v886, 16
  %v891 = vshll.u32 %v887, 16
  %v892 = vshrl.u32 %v887, 16
  %vm893 = vc.u32 %v885, %v889
  %v894 = vsel %vm893, 1, 0
  %v895 = vadd.s32 %v885, %v889
  %v896 = vadd.s32 %v888, %v894
  %vm897 = vc.u32 %v895, %v891
  %v898 = vsel %vm897, 1, 0
  %v899 = vadd.s32 %v895, %v891
  %v900 = vadd.s32 %v896, %v898
  %v901 = vadd.s32 %v900, %v890
  %v902 = vadd.s32 %v901, %v892
  %v903 = vand.u32 %v880, 65535
  %v904 = vshrl.u32 %v880, 16
  %v905 = vand.u32 %v875, 65535
  %v906 = vshrl.u32 %v875, 16
  %v907 = vmul.u32 %v903, %v905
  %v908 = vmul.u32 %v903, %v906
  %v909 = vmul.u32 %v904, %v905
  %v910 = vmul.u32 %v904, %v906
  %v911 = vshll.u32 %v908, 16
  %v912 = vshrl.u32 %v908, 16
  %v913 = vshll.u32 %v909, 16
  %v914 = vshrl.u32 %v909, 16
  %vm915 = vc.u32 %v907, %v911
  %v916 = vsel %vm915, 1, 0
  %v917 = vadd.s32 %v907, %v911
  %v918 = vadd.s32 %v910, %v916
  %vm919 = vc.u32 %v917, %v913
  %v920 = vsel %vm919, 1, 0
  %v921 = vadd.s32 %v917, %v913
  %v922 = vadd.s32 %v918, %v920
  %v923 = vadd.s32 %v922, %v912
  %v924 = vadd.s32 %v923, %v914
  %v925 = vmul.u32 %v880, %v871
  %v926 = vadd.s32 %v902, %v921
  %vm927 = vc.u32 %v902, %v921
  %v928 = vadd.s32 %v924, 1
  %v929 = vsel %vm927, %v928, %v924
  %v930 = vadd.s32 %v925, %v929
  %v931 = vadd.s32 %v930, 536870912
  %v932 = vshrl.u32 %v931, 30
  %v933 = vshll.u32 %v932, 30
  %v934 = vsub.s32 %v930, %v933
  %vm935 = vcmp.lt.s32.totalorder %v934, 0
  %v936 = vsub.s32 0, %v934
  %v937 = vsel %vm935, %v936, %v934
  %v938 = vclz %v937
  %v939 = vsub.s32 %v938, 2
  %vm940 = vcmp.gt.s32.totalorder 0, %v939
  %v941 = vsel %vm940, 0, %v939
  %v942 = vsub.s32 32, %v941
  %v943 = vshll.u32 %v934, %v941
  %v944 = vshrl.u32 %v926, %v942
  %v945 = vor.u32 %v943, %v944
  %v946 = vsub.s32 4294967266, %v941
  %v947 = vadd.s32 %v946, 127
  %v948 = vshll.u32 %v947, 23
  %v949 = vor.u32 4788187, %v948
  %v950 = vand.u32 2147483647, %v949
  %v952 = vcvt.s32.f32 %v945
  %v953 = vmul.f32 %v952, %v950
  %v954 = vxor.u32 %v953, 2147483648
  %v955 = vsel %vm834, %v954, %v953
  %v956 = vsub.s32 4, %v932
  %v957 = vsel %vm834, %v956, %v932
  %v958 = vsel %vm833, %v54, %v955
  %v959 = vsel %vm833, 0, %v957
  %v960 = vmul.f32 %v958, %v958
  %v961 = vmul.f32 %v960, -0.001358992
  %v962 = vadd.f32 %v961, 0.041655596
  %v963 = vmul.f32 %v960, %v962
  %v964 = vadd.f32 %v963, -0.4999988
  %v965 = vmul.f32 %v960, %v964
  %v966 = vadd.f32 1.0, %v965
  %v967 = vmul.f32 %v958, %v958
  %v968 = vmul.f32 %v967, -0.00019511016
  %v969 = vadd.f32 %v968, 0.008332121
  %v970 = vmul.f32 %v967, %v969
  %v971 = vadd.f32 %v970, -0.16666654
  %v972 = vmul.f32 %v967, %v971
  %v973 = vadd.f32 %v972, 1.0
  %v974 = vmul.f32 %v973, %v958
  %vm975 = vweird.f32 %v54
  %v976 = vadd.s32 %v959, 3
  %v977 = vand.u32 %v976, 3
  %vm978 = vcmp.lt.s32.totalorder %v977, 2
  %vm979 = vcmp.eq.s32.totalorder %v977, 0
  %v980 = vxor.u32 %v974, 2147483648
  %v981 = vsel %vm979, %v966, %v980
  %vm982 = vcmp.eq.s32.totalorder %v977, 2
  %v983 = vxor.u32 %v966, 2147483648
  %v984 = vsel %vm982, %v983, %v974
  %v985 = vsel %vm978, %v981, %v984
  %v986 = vsel %vm975, nan, %v985
  %v987 = vand.u32 2147483647, %v55
  %vm988 = vcmp.le.f32.partialorder %v987, 0.7853982
  %vm989 = vcmp.lt.s32.totalorder %v55, 0
  %v990 = vand.u32 %v55, 2139095040
  %v991 = vshrl.u32 %v990, 23
  %v992 = vsub.s32 %v991, 127
  %v993 = vand.u32 2147483647, %v55
  %v994 = vand.u32 %v993, 8388607
  %v995 = vor.u32 %v994, 8388608
  %v996 = vsub.s32 0, %v995
  %v997 = vadd.s32 %v992, 1
  %vm998 = vcmp.gt.s32.totalorder %v997, 0
  %v999 = vsel %vm998, %v997, 0
  %v1000 = vshrl.u32 %v999, 5
  %v1001 = vand.u32 %v999, 31
  %v1002 = vsub.s32 32, %v1001
  %v1003 = vshrl.u32 683565275, %v1002
  %v1004 = vshll.u32 683565275, %v1001
  %v1005 = vshrl.u32 2475754826, %v1002
  %v1006 = vor.u32 %v1004, %v1005
  %v1007 = vshll.u32 2475754826, %v1001
  %v1008 = vshrl.u32 2131351028, %v1002
  %v1009 = vor.u32 %v1007, %v1008
  %v1010 = vshll.u32 2131351028, %v1001
  %v1011 = vshrl.u32 2102212464, %v1002
  %v1012 = vor.u32 %v1010, %v1011
  %v1013 = vshll.u32 2102212464, %v1001
  %v1014 = vshrl.u32 920167782, %v1002
  %v1015 = vor.u32 %v1013, %v1014
  %v1016 = vshll.u32 920167782, %v1001
  %v1017 = vshrl.u32 1326507024, %v1002
  %v1018 = vor.u32 %v1016, %v1017
  %vm1019 = vcmp.lt.s32.totalorder %v1000, 1
  %vm1020 = vcmp.lt.s32.totalorder %v1000, 2
  %vm1021 = vcmp.lt.s32.totalorder %v1000, 3
  %vm1022 = vcmp.lt.s32.totalorder %v1000, 4
  %v1023 = vsel %vm1019, %v1003, %v1006
  %v1024 = vsel %vm1022, %v1012, 2102212464
  %v1025 = vsel %vm1021, %v1009, %v1024
  %v1026 = vsel %vm1020, %v1023, %v1025
  %v1027 = vsel %vm1019, %v1006, %v1009
  %v1028 = vsel %vm1022, %v1015, 920167782
  %v1029 = vsel %vm1021, %v1012, %v1028
  %v1030 = vsel %vm1020, %v1027, %v1029
  %v1031 = vsel %vm1019, %v1009, %v1012
  %v1032 = vsel %vm1022, %v1018, 1326507024
  %v1033 = vsel %vm1021, %v1015, %v1032
  %v1034 = vsel %vm1020, %v1031, %v1033
  %v1035 = vshll.u32 %v995, 8
  %v1036 = vand.u32 %v1035, 65535
  %v1037 = vshrl.u32 %v1035, 16
  %v1038 = vand.u32 %v1034, 65535
  %v1039 = vshrl.u32 %v1034, 16
  %v1040 = vmul.u32 %v1036, %v1038
  %v1041 = vmul.u32 %v1036, %v1039
  %v1042 = vmul.u32 %v1037, %v1038
  %v1043 = vmul.u32 %v1037, %v1039
  %v1044 = vshll.u32 %v1041, 16
  %v1045 = vshrl.u32 %v1041, 16
  %v1046 = vshll.u32 %v1042, 16
  %v1047 = vshrl.u32 %v1042, 16
  %vm1048 = vc.u32 %v1040, %v1044
  %v1049 = vsel %vm1048, 1, 0
  %v1050 = vadd.s32 %v1040, %v1044
  %v1051 = vadd.s32 %v1043, %v1049
  %vm1052 = vc.u32 %v1050, %v1046
  %v1053 = vsel %vm1052, 1, 0
  %v1054 = vadd.s32 %v1050, %v1046
  %v1055 = vadd.s32 %v1051, %v1053
  %v1056 = vadd.s32 %v1055, %v1045
  %v1057 = vadd.s32 %v1056, %v1047
  %v1058 = vand.u32 %v1035, 65535
  %v1059 = vshrl.u32 %v1035, 16
  %v1060 = vand.u32 %v1030, 65535
  %v1061 = vshrl.u32 %v1030, 16
  %v1062 = vmul.u32 %v1058, %v1060
  %v1063 = vmul.u32 %v1058, %v1061
  %v1064 = vmul.u32 %v1059, %v1060
  %v1065 = vmul.u32 %v1059, %v1061
  %v1066 = vshll.u32 %v1063, 16
  %v1067 = vshrl.u32 %v1063, 16
  %v1068 = vshll.u32 %v1064, 16
  %v1069 = vshrl.u32 %v1064, 16
  %vm1070 = vc.u32 %v1062, %v1066
  %v1071 = vsel %vm1070, 1, 0
  %v1072 = vadd.s32 %v1062, %v1066
  %v1073 = vadd.s32 %v1065, %v1071
  %vm1074 = vc.u32 %v1072, %v1068
  %v1075 = vsel %vm1074, 1, 0
  %v1076 = vadd.s32 %v1072, %v1068
  %v1077 = vadd.s32 %v1073, %v1075
  %v1078 = vadd.s32 %v1077, %v1067
  %v1079 = vadd.s32 %v1078, %v1069
  %v1080 = vmul.u32 %v1035, %v1026
  %v1081 = vadd.s32 %v1057, %v1076
  %vm1082 = vc.u32 %v1057, %v1076
  %v1083 = vadd.s32 %v1079, 1
  %v1084 = vsel %vm1082, %v1083, %v1079
  %v1085 = vadd.s32 %v1080, %v1084
  %v1086 = vadd.s32 %v1085, 536870912
  %v1087 = vshrl.u32 %v1086, 30
  %v1088 = vshll.u32 %v1087, 30
  %v1089 = vsub.s32 %v1085, %v1088
  %vm1090 = vcmp.lt.s32.totalorder %v1089, 0
  %v1091 = vsub.s32 0, %v1089
  %v1092 = vsel %vm1090, %v1091, %v1089
  %v1093 = vclz %v1092
  %v1094 = vsub.s32 %v1093, 2
  %vm1095 = vcmp.gt.s32.totalorder 0, %v1094
  %v1096 = vsel %vm1095, 0, %v1094
  %v1097 = vsub.s32 32, %v1096
  %v1098 = vshll.u32 %v1089, %v1096
  %v1099 = vshrl.u32 %v1081, %v1097
  %v1100 = vor.u32 %v1098, %v1099
  %v1101 = vsub.s32 4294967266, %v1096
  %v1102 = vadd.s32 %v1101, 127
  %v1103 = vshll.u32 %v1102, 23
  %v1104 = vor.u32 4788187, %v1103
  %v1105 = vand.u32 2147483647, %v1104
  %v1107 = vcvt.s32.f32 %v1100
  %v1108 = vmul.f32 %v1107, %v1105
  %v1109 = vxor.u32 %v1108, 2147483648
  %v1110 = vsel %vm989, %v1109, %v1108
  %v1111 = vsub.s32 4, %v1087
  %v1112 = vsel %vm989, %v1111, %v1087
  %v1113 = vsel %vm988, %v55, %v1110
  %v1114 = vsel %vm988, 0, %v1112
  %v1115 = vmul.f32 %v1113, %v1113
  %v1116 = vmul.f32 %v1115, -0.001358992
  %v1117 = vadd.f32 %v1116, 0.041655596
  %v1118 = vmul.f32 %v1115, %v1117
  %v1119 = vadd.f32 %v1118, -0.4999988
  %v1120 = vmul.f32 %v1115, %v1119
  %v1121 = vadd.f32 1.0, %v1120
  %v1122 = vmul.f32 %v1113, %v1113
  %v1123 = vmul.f32 %v1122, -0.00019511016
  %v1124 = vadd.f32 %v1123, 0.008332121
  %v1125 = vmul.f32 %v1122, %v1124
  %v1126 = vadd.f32 %v1125, -0.16666654
  %v1127 = vmul.f32 %v1122, %v1126
  %v1128 = vadd.f32 %v1127, 1.0
  %v1129 = vmul.f32 %v1128, %v1113
  %vm1130 = vweird.f32 %v55
  %v1131 = vadd.s32 %v1114, 3
  %v1132 = vand.u32 %v1131, 3
  %vm1133 = vcmp.lt.s32.totalorder %v1132, 2
  %vm1134 = vcmp.eq.s32.totalorder %v1132, 0
  %v1135 = vxor.u32 %v1129, 2147483648
  %v1136 = vsel %vm1134, %v1121, %v1135
  %vm1137 = vcmp.eq.s32.totalorder %v1132, 2
  %v1138 = vxor.u32 %v1121, 2147483648
  %v1139 = vsel %vm1137, %v1138, %v1129
  %v1140 = vsel %vm1133, %v1136, %v1139
  %v1141 = vsel %vm1130, nan, %v1140
  %v1142 = vand.u32 2147483647, %v56
  %vm1143 = vcmp.le.f32.partialorder %v1142, 0.7853982
  %vm1144 = vcmp.lt.s32.totalorder %v56, 0
  %v1145 = vand.u32 %v56, 2139095040
  %v1146 = vshrl.u32 %v1145, 23
  %v1147 = vsub.s32 %v1146, 127
  %v1148 = vand.u32 2147483647, %v56
  %v1149 = vand.u32 %v1148, 8388607
  %v1150 = vor.u32 %v1149, 8388608
  %v1151 = vsub.s32 0, %v1150
  %v1152 = vadd.s32 %v1147, 1
  %vm1153 = vcmp.gt.s32.totalorder %v1152, 0
  %v1154 = vsel %vm1153, %v1152, 0
  %v1155 = vshrl.u32 %v1154, 5
  %v1156 = vand.u32 %v1154, 31
  %v1157 = vsub.s32 32, %v1156
  %v1158 = vshrl.u32 683565275, %v1157
  %v1159 = vshll.u32 683565275, %v1156
  %v1160 = vshrl.u32 2475754826, %v1157
  %v1161 = vor.u32 %v1159, %v1160
  %v1162 = vshll.u32 2475754826, %v1156
  %v1163 = vshrl.u32 2131351028, %v1157
  %v1164 = vor.u32 %v1162, %v1163
  %v1165 = vshll.u32 2131351028, %v1156
  %v1166 = vshrl.u32 2102212464, %v1157
  %v1167 = vor.u32 %v1165, %v1166
  %v1168 = vshll.u32 2102212464, %v1156
  %v1169 = vshrl.u32 920167782, %v1157
  %v1170 = vor.u32 %v1168, %v1169
  %v1171 = vshll.u32 920167782, %v1156
  %v1172 = vshrl.u32 1326507024, %v1157
  %v1173 = vor.u32 %v1171, %v1172
  %vm1174 = vcmp.lt.s32.totalorder %v1155, 1
  %vm1175 = vcmp.lt.s32.totalorder %v1155, 2
  %vm1176 = vcmp.lt.s32.totalorder %v1155, 3
  %vm1177 = vcmp.lt.s32.totalorder %v1155, 4
  %v1178 = vsel %vm1174, %v1158, %v1161
  %v1179 = vsel %vm1177, %v1167, 2102212464
  %v1180 = vsel %vm1176, %v1164, %v1179
  %v1181 = vsel %vm1175, %v1178, %v1180
  %v1182 = vsel %vm1174, %v1161, %v1164
  %v1183 = vsel %vm1177, %v1170, 920167782
  %v1184 = vsel %vm1176, %v1167, %v1183
  %v1185 = vsel %vm1175, %v1182, %v1184
  %v1186 = vsel %vm1174, %v1164, %v1167
  %v1187 = vsel %vm1177, %v1173, 1326507024
  %v1188 = vsel %vm1176, %v1170, %v1187
  %v1189 = vsel %vm1175, %v1186, %v1188
  %v1190 = vshll.u32 %v1150, 8
  %v1191 = vand.u32 %v1190, 65535
  %v1192 = vshrl.u32 %v1190, 16
  %v1193 = vand.u32 %v1189, 65535
  %v1194 = vshrl.u32 %v1189, 16
  %v1195 = vmul.u32 %v1191, %v1193
  %v1196 = vmul.u32 %v1191, %v1194
  %v1197 = vmul.u32 %v1192, %v1193
  %v1198 = vmul.u32 %v1192, %v1194
  %v1199 = vshll.u32 %v1196, 16
  %v1200 = vshrl.u32 %v1196, 16
  %v1201 = vshll.u32 %v1197, 16
  %v1202 = vshrl.u32 %v1197, 16
  %vm1203 = vc.u32 %v1195, %v1199
  %v1204 = vsel %vm1203, 1, 0
  %v1205 = vadd.s32 %v1195, %v1199
  %v1206 = vadd.s32 %v1198, %v1204
  %vm1207 = vc.u32 %v1205, %v1201
  %v1208 = vsel %vm1207, 1, 0
  %v1209 = vadd.s32 %v1205, %v1201
  %v1210 = vadd.s32 %v1206, %v1208
  %v1211 = vadd.s32 %v1210, %v1200
  %v1212 = vadd.s32 %v1211, %v1202
  %v1213 = vand.u32 %v1190, 65535
  %v1214 = vshrl.u32 %v1190, 16
  %v1215 = vand.u32 %v1185, 65535
  %v1216 = vshrl.u32 %v1185, 16
  %v1217 = vmul.u32 %v1213, %v1215
  %v1218 = vmul.u32 %v1213, %v1216
  %v1219 = vmul.u32 %v1214, %v1215
  %v1220 = vmul.u32 %v1214, %v1216
  %v1221 = vshll.u32 %v1218, 16
  %v1222 = vshrl.u32 %v1218, 16
  %v1223 = vshll.u32 %v1219, 16
  %v1224 = vshrl.u32 %v1219, 16
  %vm1225 = vc.u32 %v1217, %v1221
  %v1226 = vsel %vm1225, 1, 0
  %v1227 = vadd.s32 %v1217, %v1221
  %v1228 = vadd.s32 %v1220, %v1226
  %vm1229 = vc.u32 %v1227, %v1223
  %v1230 = vsel %vm1229, 1, 0
  %v1231 = vadd.s32 %v1227, %v1223
  %v1232 = vadd.s32 %v1228, %v1230
  %v1233 = vadd.s32 %v1232, %v1222
  %v1234 = vadd.s32 %v1233, %v1224
  %v1235 = vmul.u32 %v1190, %v1181
  %v1236 = vadd.s32 %v1212, %v1231
  %vm1237 = vc.u32 %v1212, %v1231
  %v1238 = vadd.s32 %v1234, 1
  %v1239 = vsel %vm1237, %v1238, %v1234
  %v1240 = vadd.s32 %v1235, %v1239
  %v1241 = vadd.s32 %v1240, 536870912
  %v1242 = vshrl.u32 %v1241, 30
  %v1243 = vshll.u32 %v1242, 30
  %v1244 = vsub.s32 %v1240, %v1243
  %vm1245 = vcmp.lt.s32.totalorder %v1244, 0
  %v1246 = vsub.s32 0, %v1244
  %v1247 = vsel %vm1245, %v1246, %v1244
  %v1248 = vclz %v1247
  %v1249 = vsub.s32 %v1248, 2
  %vm1250 = vcmp.gt.s32.totalorder 0, %v1249
  %v1251 = vsel %vm1250, 0, %v1249
  %v1252 = vsub.s32 32, %v1251
  %v1253 = vshll.u32 %v1244, %v1251
  %v1254 = vshrl.u32 %v1236, %v1252
  %v1255 = vor.u32 %v1253, %v1254
  %v1256 = vsub.s32 4294967266, %v1251
  %v1257 = vadd.s32 %v1256, 127
  %v1258 = vshll.u32 %v1257, 23
  %v1259 = vor.u32 4788187, %v1258
  %v1260 = vand.u32 2147483647, %v1259
  %v1262 = vcvt.s32.f32 %v1255
  %v1263 = vmul.f32 %v1262, %v1260
  %v1264 = vxor.u32 %v1263, 2147483648
  %v1265 = vsel %vm1144, %v1264, %v1263
  %v1266 = vsub.s32 4, %v1242
  %v1267 = vsel %vm1144, %v1266, %v1242
  %v1268 = vsel %vm1143, %v56, %v1265
  %v1269 = vsel %vm1143, 0, %v1267
  %v1270 = vmul.f32 %v1268, %v1268
  %v1271 = vmul.f32 %v1270, -0.001358992
  %v1272 = vadd.f32 %v1271, 0.041655596
  %v1273 = vmul.f32 %v1270, %v1272
  %v1274 = vadd.f32 %v1273, -0.4999988
  %v1275 = vmul.f32 %v1270, %v1274
  %v1276 = vadd.f32 1.0, %v1275
  %v1277 = vmul.f32 %v1268, %v1268
  %v1278 = vmul.f32 %v1277, -0.00019511016
  %v1279 = vadd.f32 %v1278, 0.008332121
  %v1280 = vmul.f32 %v1277, %v1279
  %v1281 = vadd.f32 %v1280, -0.16666654
  %v1282 = vmul.f32 %v1277, %v1281
  %v1283 = vadd.f32 %v1282, 1.0
  %v1284 = vmul.f32 %v1283, %v1268
  %vm1285 = vweird.f32 %v56
  %v1286 = vadd.s32 %v1269, 3
  %v1287 = vand.u32 %v1286, 3
  %vm1288 = vcmp.lt.s32.totalorder %v1287, 2
  %vm1289 = vcmp.eq.s32.totalorder %v1287, 0
  %v1290 = vxor.u32 %v1284, 2147483648
  %v1291 = vsel %vm1289, %v1276, %v1290
  %vm1292 = vcmp.eq.s32.totalorder %v1287, 2
  %v1293 = vxor.u32 %v1276, 2147483648
  %v1294 = vsel %vm1292, %v1293, %v1284
  %v1295 = vsel %vm1288, %v1291, %v1294
  %v1296 = vsel %vm1285, nan, %v1295
  %v1298 = vperm.slane %v29, 0
  %v1299 = vperm.slane %v29, 1
  %v1300 = vperm.slane %v29, 2
  %v1301 = vperm.slane %v29, 3
  %v1306 = vmul.f32 %v211, %v1298
  %v1307 = vmul.f32 %v366, %v1299
  %v1308 = vmul.f32 %v521, %v1300
  %v1309 = vmul.f32 %v676, %v1301
  %v1310 = vmul.f32 %v831, %v1298
  %v1311 = vmul.f32 %v986, %v1299
  %v1312 = vmul.f32 %v1141, %v1300
  %v1313 = vmul.f32 %v1296, %v1301
  %v1314 = vsel %vm14, 1, 0
  %v1315 = vperm.slane %v1314, 0
  %v1316 = vperm.slane %v1314, 1
  %v1317 = vperm.slane %v1314, 2
  %v1318 = vperm.slane %v1314, 3
  %vm1319 = vcmp.eq.s32.totalorder %v1315, 1
  %vm1320 = vcmp.eq.s32.totalorder %v1316, 1
  %vm1321 = vcmp.eq.s32.totalorder %v1317, 1
  %vm1322 = vcmp.eq.s32.totalorder %v1318, 1
  %v1323 = vsel %vm1319, %v33, %v1306
  %v1324 = vsel %vm1320, %v33, %v1307
  %v1325 = vsel %vm1321, %v33, %v1308
  %v1326 = vsel %vm1322, %v33, %v1309
  %v1327 = vsel %vm1319, %v38, %v1310
  %v1328 = vsel %vm1320, %v38, %v1311
  %v1329 = vsel %vm1321, %v38, %v1312
  %v1330 = vsel %vm1322, %v38, %v1313
  %1331 = vxpose.xlu0.b32.start [1/16] %v1323, 128
  %1332 = vxpose.xlu0.b32.cont [2/16] %v1327, 128
  %1333 = vxpose.xlu0.b32.cont [3/16] 0.0, 128
  %1334 = vxpose.xlu0.b32.cont [4/16] 0.0, 128
  %1335 = vxpose.xlu0.b32.cont [5/16] 0.0, 128
  %1336 = vxpose.xlu0.b32.cont [6/16] 0.0, 128
  %1337 = vxpose.xlu0.b32.cont [7/16] 0.0, 128
  %1338 = vxpose.xlu0.b32.cont [8/16] 0.0, 128
  %1339 = vxpose.xlu0.b32.cont [9/16] 0.0, 128
  %1340 = vxpose.xlu0.b32.cont [10/16] 0.0, 128
  %1341 = vxpose.xlu0.b32.cont [11/16] 0.0, 128
  %1342 = vxpose.xlu0.b32.cont [12/16] 0.0, 128
  %1343 = vxpose.xlu0.b32.cont [13/16] 0.0, 128
  %1344 = vxpose.xlu0.b32.cont [14/16] 0.0, 128
  %1345 = vxpose.xlu0.b32.cont [15/16] 0.0, 128
  %1346 = vxpose.xlu0.b32.end [16/16] 0.0, 128
  %v1347 = vpop.trf.xlu0
  %v1348 = vpop.trf.xlu0
  %v1349 = vpop.trf.xlu0
  %v1350 = vpop.trf.xlu0
  %v1351 = vpop.trf.xlu0
  %v1352 = vpop.trf.xlu0
  %v1353 = vpop.trf.xlu0
  %v1354 = vpop.trf.xlu0
  %v1355 = vpop.trf.xlu0
  %v1356 = vpop.trf.xlu0
  %v1357 = vpop.trf.xlu0
  %v1358 = vpop.trf.xlu0
  %v1359 = vpop.trf.xlu0
  %v1360 = vpop.trf.xlu0
  %v1361 = vpop.trf.xlu0
  %v1362 = vpop.trf.xlu0
  %1363 = vxpose.xlu0.b32.start [1/16] %v1324, 128
  %1364 = vxpose.xlu0.b32.cont [2/16] %v1328, 128
  %1365 = vxpose.xlu0.b32.cont [3/16] 0.0, 128
  %1366 = vxpose.xlu0.b32.cont [4/16] 0.0, 128
  %1367 = vxpose.xlu0.b32.cont [5/16] 0.0, 128
  %1368 = vxpose.xlu0.b32.cont [6/16] 0.0, 128
  %1369 = vxpose.xlu0.b32.cont [7/16] 0.0, 128
  %1370 = vxpose.xlu0.b32.cont [8/16] 0.0, 128
  %1371 = vxpose.xlu0.b32.cont [9/16] 0.0, 128
  %1372 = vxpose.xlu0.b32.cont [10/16] 0.0, 128
  %1373 = vxpose.xlu0.b32.cont [11/16] 0.0, 128
  %1374 = vxpose.xlu0.b32.cont [12/16] 0.0, 128
  %1375 = vxpose.xlu0.b32.cont [13/16] 0.0, 128
  %1376 = vxpose.xlu0.b32.cont [14/16] 0.0, 128
  %1377 = vxpose.xlu0.b32.cont [15/16] 0.0, 128
  %1378 = vxpose.xlu0.b32.end [16/16] 0.0, 128
  %v1379 = vpop.trf.xlu0
  %v1380 = vpop.trf.xlu0
  %v1381 = vpop.trf.xlu0
  %v1382 = vpop.trf.xlu0
  %v1383 = vpop.trf.xlu0
  %v1384 = vpop.trf.xlu0
  %v1385 = vpop.trf.xlu0
  %v1386 = vpop.trf.xlu0
  %v1387 = vpop.trf.xlu0
  %v1388 = vpop.trf.xlu0
  %v1389 = vpop.trf.xlu0
  %v1390 = vpop.trf.xlu0
  %v1391 = vpop.trf.xlu0
  %v1392 = vpop.trf.xlu0
  %v1393 = vpop.trf.xlu0
  %v1394 = vpop.trf.xlu0
  %1395 = vxpose.xlu0.b32.start [1/16] %v1325, 128
  %1396 = vxpose.xlu0.b32.cont [2/16] %v1329, 128
  %1397 = vxpose.xlu0.b32.cont [3/16] 0.0, 128
  %1398 = vxpose.xlu0.b32.cont [4/16] 0.0, 128
  %1399 = vxpose.xlu0.b32.cont [5/16] 0.0, 128
  %1400 = vxpose.xlu0.b32.cont [6/16] 0.0, 128
  %1401 = vxpose.xlu0.b32.cont [7/16] 0.0, 128
  %1402 = vxpose.xlu0.b32.cont [8/16] 0.0, 128
  %1403 = vxpose.xlu0.b32.cont [9/16] 0.0, 128
  %1404 = vxpose.xlu0.b32.cont [10/16] 0.0, 128
  %1405 = vxpose.xlu0.b32.cont [11/16] 0.0, 128
  %1406 = vxpose.xlu0.b32.cont [12/16] 0.0, 128
  %1407 = vxpose.xlu0.b32.cont [13/16] 0.0, 128
  %1408 = vxpose.xlu0.b32.cont [14/16] 0.0, 128
  %1409 = vxpose.xlu0.b32.cont [15/16] 0.0, 128
  %1410 = vxpose.xlu0.b32.end [16/16] 0.0, 128
  %v1411 = vpop.trf.xlu0
  %v1412 = vpop.trf.xlu0
  %v1413 = vpop.trf.xlu0
  %v1414 = vpop.trf.xlu0
  %v1415 = vpop.trf.xlu0
  %v1416 = vpop.trf.xlu0
  %v1417 = vpop.trf.xlu0
  %v1418 = vpop.trf.xlu0
  %v1419 = vpop.trf.xlu0
  %v1420 = vpop.trf.xlu0
  %v1421 = vpop.trf.xlu0
  %v1422 = vpop.trf.xlu0
  %v1423 = vpop.trf.xlu0
  %v1424 = vpop.trf.xlu0
  %v1425 = vpop.trf.xlu0
  %v1426 = vpop.trf.xlu0
  %1427 = vxpose.xlu0.b32.start [1/16] %v1326, 128
  %1428 = vxpose.xlu0.b32.cont [2/16] %v1330, 128
  %1429 = vxpose.xlu0.b32.cont [3/16] 0.0, 128
  %1430 = vxpose.xlu0.b32.cont [4/16] 0.0, 128
  %1431 = vxpose.xlu0.b32.cont [5/16] 0.0, 128
  %1432 = vxpose.xlu0.b32.cont [6/16] 0.0, 128
  %1433 = vxpose.xlu0.b32.cont [7/16] 0.0, 128
  %1434 = vxpose.xlu0.b32.cont [8/16] 0.0, 128
  %1435 = vxpose.xlu0.b32.cont [9/16] 0.0, 128
  %1436 = vxpose.xlu0.b32.cont [10/16] 0.0, 128
  %1437 = vxpose.xlu0.b32.cont [11/16] 0.0, 128
  %1438 = vxpose.xlu0.b32.cont [12/16] 0.0, 128
  %1439 = vxpose.xlu0.b32.cont [13/16] 0.0, 128
  %1440 = vxpose.xlu0.b32.cont [14/16] 0.0, 128
  %1441 = vxpose.xlu0.b32.cont [15/16] 0.0, 128
  %1442 = vxpose.xlu0.b32.end [16/16] 0.0, 128
  %v1443 = vpop.trf.xlu0
  %v1444 = vpop.trf.xlu0
  %v1445 = vpop.trf.xlu0
  %v1446 = vpop.trf.xlu0
  %v1447 = vpop.trf.xlu0
  %v1448 = vpop.trf.xlu0
  %v1449 = vpop.trf.xlu0
  %v1450 = vpop.trf.xlu0
  %v1451 = vpop.trf.xlu0
  %v1452 = vpop.trf.xlu0
  %v1453 = vpop.trf.xlu0
  %v1454 = vpop.trf.xlu0
  %v1455 = vpop.trf.xlu0
  %v1456 = vpop.trf.xlu0
  %v1457 = vpop.trf.xlu0
  %v1458 = vpop.trf.xlu0
  %vm1459 = vcmask 130048
  %1460 = vst.msk [vmem:[%s2] sm:$0xff] %vm1459, %v1347
  %1461 = vst.msk [vmem:[%s2 + $0x8] sm:$0xff] %vm1459, %v1348
  %1462 = vst.msk [vmem:[%s2 + $0x10] sm:$0xff] %vm1459, %v1349
  %1463 = vst.msk [vmem:[%s2 + $0x18] sm:$0xff] %vm1459, %v1350
  %1464 = vst.msk [vmem:[%s2 + $0x20] sm:$0xff] %vm1459, %v1351
  %1465 = vst.msk [vmem:[%s2 + $0x28] sm:$0xff] %vm1459, %v1352
  %1466 = vst.msk [vmem:[%s2 + $0x30] sm:$0xff] %vm1459, %v1353
  %1467 = vst.msk [vmem:[%s2 + $0x38] sm:$0xff] %vm1459, %v1354
  %1468 = vst.msk [vmem:[%s2 + $0x40] sm:$0xff] %vm1459, %v1355
  %1469 = vst.msk [vmem:[%s2 + $0x48] sm:$0xff] %vm1459, %v1356
  %1470 = vst.msk [vmem:[%s2 + $0x50] sm:$0xff] %vm1459, %v1357
  %1471 = vst.msk [vmem:[%s2 + $0x58] sm:$0xff] %vm1459, %v1358
  %1472 = vst.msk [vmem:[%s2 + $0x60] sm:$0xff] %vm1459, %v1359
  %1473 = vst.msk [vmem:[%s2 + $0x68] sm:$0xff] %vm1459, %v1360
  %1474 = vst.msk [vmem:[%s2 + $0x70] sm:$0xff] %vm1459, %v1361
  %1475 = vst.msk [vmem:[%s2 + $0x78] sm:$0xff] %vm1459, %v1362
  %1476 = vst.msk [vmem:[%s2 + $0x80] sm:$0xff] %vm1459, %v1379
  %1477 = vst.msk [vmem:[%s2 + $0x88] sm:$0xff] %vm1459, %v1380
  %1478 = vst.msk [vmem:[%s2 + $0x90] sm:$0xff] %vm1459, %v1381
  %1479 = vst.msk [vmem:[%s2 + $0x98] sm:$0xff] %vm1459, %v1382
  %1480 = vst.msk [vmem:[%s2 + $0xa0] sm:$0xff] %vm1459, %v1383
  %1481 = vst.msk [vmem:[%s2 + $0xa8] sm:$0xff] %vm1459, %v1384
  %1482 = vst.msk [vmem:[%s2 + $0xb0] sm:$0xff] %vm1459, %v1385
  %1483 = vst.msk [vmem:[%s2 + $0xb8] sm:$0xff] %vm1459, %v1386
  %1484 = vst.msk [vmem:[%s2 + $0xc0] sm:$0xff] %vm1459, %v1387
  %1485 = vst.msk [vmem:[%s2 + $0xc8] sm:$0xff] %vm1459, %v1388
  %1486 = vst.msk [vmem:[%s2 + $0xd0] sm:$0xff] %vm1459, %v1389
  %1487 = vst.msk [vmem:[%s2 + $0xd8] sm:$0xff] %vm1459, %v1390
  %1488 = vst.msk [vmem:[%s2 + $0xe0] sm:$0xff] %vm1459, %v1391
  %1489 = vst.msk [vmem:[%s2 + $0xe8] sm:$0xff] %vm1459, %v1392
  %1490 = vst.msk [vmem:[%s2 + $0xf0] sm:$0xff] %vm1459, %v1393
  %1491 = vst.msk [vmem:[%s2 + $0xf8] sm:$0xff] %vm1459, %v1394
  %1492 = vst.msk [vmem:[%s2 + $0x100] sm:$0xff] %vm1459, %v1411
  %1493 = vst.msk [vmem:[%s2 + $0x108] sm:$0xff] %vm1459, %v1412
  %1494 = vst.msk [vmem:[%s2 + $0x110] sm:$0xff] %vm1459, %v1413
  %1495 = vst.msk [vmem:[%s2 + $0x118] sm:$0xff] %vm1459, %v1414
  %1496 = vst.msk [vmem:[%s2 + $0x120] sm:$0xff] %vm1459, %v1415
  %1497 = vst.msk [vmem:[%s2 + $0x128] sm:$0xff] %vm1459, %v1416
  %1498 = vst.msk [vmem:[%s2 + $0x130] sm:$0xff] %vm1459, %v1417
  %1499 = vst.msk [vmem:[%s2 + $0x138] sm:$0xff] %vm1459, %v1418
  %1500 = vst.msk [vmem:[%s2 + $0x140] sm:$0xff] %vm1459, %v1419
  %1501 = vst.msk [vmem:[%s2 + $0x148] sm:$0xff] %vm1459, %v1420
  %1502 = vst.msk [vmem:[%s2 + $0x150] sm:$0xff] %vm1459, %v1421
  %1503 = vst.msk [vmem:[%s2 + $0x158] sm:$0xff] %vm1459, %v1422
  %1504 = vst.msk [vmem:[%s2 + $0x160] sm:$0xff] %vm1459, %v1423
  %1505 = vst.msk [vmem:[%s2 + $0x168] sm:$0xff] %vm1459, %v1424
  %1506 = vst.msk [vmem:[%s2 + $0x170] sm:$0xff] %vm1459, %v1425
  %1507 = vst.msk [vmem:[%s2 + $0x178] sm:$0xff] %vm1459, %v1426
  %1508 = vst.msk [vmem:[%s2 + $0x180] sm:$0xff] %vm1459, %v1443
  %1509 = vst.msk [vmem:[%s2 + $0x188] sm:$0xff] %vm1459, %v1444
  %1510 = vst.msk [vmem:[%s2 + $0x190] sm:$0xff] %vm1459, %v1445
  %1511 = vst.msk [vmem:[%s2 + $0x198] sm:$0xff] %vm1459, %v1446
  %1512 = vst.msk [vmem:[%s2 + $0x1a0] sm:$0xff] %vm1459, %v1447
  %1513 = vst.msk [vmem:[%s2 + $0x1a8] sm:$0xff] %vm1459, %v1448
  %1514 = vst.msk [vmem:[%s2 + $0x1b0] sm:$0xff] %vm1459, %v1449
  %1515 = vst.msk [vmem:[%s2 + $0x1b8] sm:$0xff] %vm1459, %v1450
  %1516 = vst.msk [vmem:[%s2 + $0x1c0] sm:$0xff] %vm1459, %v1451
  %1517 = vst.msk [vmem:[%s2 + $0x1c8] sm:$0xff] %vm1459, %v1452
  %1518 = vst.msk [vmem:[%s2 + $0x1d0] sm:$0xff] %vm1459, %v1453
  %1519 = vst.msk [vmem:[%s2 + $0x1d8] sm:$0xff] %vm1459, %v1454
  %1520 = vst.msk [vmem:[%s2 + $0x1e0] sm:$0xff] %vm1459, %v1455
  %1521 = vst.msk [vmem:[%s2 + $0x1e8] sm:$0xff] %vm1459, %v1456
  %1522 = vst.msk [vmem:[%s2 + $0x1f0] sm:$0xff] %vm1459, %v1457
  %1523 = vst.msk [vmem:[%s2 + $0x1f8] sm:$0xff] %vm1459, %v1458
  // Predicated region
  $region10: #{tpu_custom_call.1} parent=0 // pred_check
    _
  $region11: #{tpu_custom_call.1} parent=0 // pred_check_branch
    %1525 = sbr.rel (0) target = $region13
  $region12: #{tpu_custom_call.1} parent=0 // pred_region
    _
  $region13: #{tpu_custom_call.1} parent=0 // pred_fallthru
    _
  // Predicated region
  $region14: #{tpu_custom_call.1} parent=0 // pred_check
    _
  $region15: #{tpu_custom_call.1} parent=0 // pred_check_branch
    %1527 = sbr.rel (0) target = $region17
  $region16: #{tpu_custom_call.1} parent=0 // pred_region
    _
  $region17: #{tpu_custom_call.1} parent=0 // pred_fallthru
    _

</llo_original>
